<compile_context>
chip_gen: v7x
topology: tpu7x:2x2x1
jax: 0.10.0
libtpu: 0.0.40
codegen_flags: <defaults>
</compile_context>

<pallas_src>
import jax
import jax.numpy as jnp
from jax.experimental import pallas as pl
from jax.experimental.pallas import tpu as pltpu


def _multi_nce_kernel(logits_ref, labels_ref, out_ref):
    x = logits_ref[...].astype(jnp.float32)   # (TR, C)
    y = labels_ref[...].astype(jnp.float32)   # (TR, C)

    # Numerically-stable, divide-free log form of -log(sum(softmax(x) * y)):
    #   log(sum(exp(x - m))) - log(sum(exp(x - m) * y))
    m = jnp.max(x, axis=1, keepdims=True)               # (TR, 1)
    e = jnp.exp(x - m)                                   # (TR, C)
    denom = jnp.sum(e, axis=1, keepdims=True)            # (TR, 1)
    pos = jnp.sum(e * y, axis=1, keepdims=True)          # (TR, 1)
    per_row = jnp.log(denom) - jnp.log(pos)              # (TR, 1)

    # One partial sum per grid step, broadcast into a lane-dense (8, 128)
    # output tile (unmasked vst; no carried accumulator -> grid is parallel).
    block_sum = jnp.sum(per_row)
    out_ref[...] = jnp.full(out_ref.shape, block_sum, dtype=jnp.float32)


def multi_nce_loss(logits: jax.Array, labels: jax.Array, *, row_tile: int | None = None):
    """Computes mean(-log(sum(softmax(logits, axis=1) * labels, axis=1)))."""
    n, c = logits.shape
    assert labels.shape == (n, c)

    itemsize = jnp.dtype(logits.dtype).itemsize

    # Auto-pick a row tile targeting ~3 MiB per input block (double-buffered
    # 2 inputs -> ~12 MiB in flight), capped at 1024 rows, multiple of 8.
    if row_tile is None:
        target_block_bytes = 3 * 1024 * 1024
        row_tile = target_block_bytes // max(1, c * itemsize)
        row_tile = max(8, min(1024, (row_tile // 8) * 8))
    row_tile = max(8, (row_tile // 8) * 8)
    # Never pick a tile (much) larger than the batch itself.
    row_tile = min(row_tile, max(8, ((n + 7) // 8) * 8))

    # Pad the batch so the grid tiles it exactly.  Padded rows are constructed
    # to contribute exactly zero loss: logits=0 -> e=1, denom=C; labels=1 ->
    # pos=C; per_row = log(C) - log(C) = 0.
    n_blocks = pl.cdiv(n, row_tile)
    n_pad = n_blocks * row_tile
    if n_pad != n:
        logits = jnp.pad(logits, ((0, n_pad - n), (0, 0)))
        labels = jnp.pad(labels, ((0, n_pad - n), (0, 0)), constant_values=1)

    partials = pl.pallas_call(
        _multi_nce_kernel,
        out_shape=jax.ShapeDtypeStruct((n_blocks * 8, 128), jnp.float32),
        grid_spec=pltpu.PrefetchScalarGridSpec(
            num_scalar_prefetch=0,
            grid=(n_blocks,),
            in_specs=[
                pl.BlockSpec((row_tile, c), lambda i: (i, 0)),
                pl.BlockSpec((row_tile, c), lambda i: (i, 0)),
            ],
            out_specs=pl.BlockSpec((8, 128), lambda i: (i, 0)),
        ),
        compiler_params=pltpu.CompilerParams(
            dimension_semantics=("parallel",),       # independent per-block partials
            vmem_limit_bytes=32 * 1024 * 1024,       # raise v5e's 16 MiB default
        ),
    )(logits, labels)

    # Each block's scalar partial sum is replicated across its (8, 128) tile;
    # pick one replica per block, sum, and divide by the ORIGINAL batch size.
    block_sums = partials[::8, 0]                    # (n_blocks,)
    return jnp.sum(block_sums) / jnp.float32(n)


def _reference(logits, labels):
    p = jax.nn.softmax(logits.astype(jnp.float32), axis=1)
    return jnp.mean(-jnp.log(jnp.sum(p * labels.astype(jnp.float32), axis=1)))


if __name__ == "__main__":
    key = jax.random.PRNGKey(0)
    k_logits, k_labels = jax.random.split(key)

    N, C = 8, 32  # small synthetic shapes: batch=8, classes=32
    logits = jax.random.normal(k_logits, (N, C), dtype=jnp.float32)

    # Multi-hot style labels: one-hot positives plus a second soft positive,
    # deterministic given the PRNG key.
    pos = jax.random.randint(k_labels, (N,), 0, C)
    labels = jax.nn.one_hot(pos, C, dtype=jnp.float32)
    labels = 0.7 * labels + 0.3 * jax.nn.one_hot((pos + 5) % C, C, dtype=jnp.float32)

    loss = jax.block_until_ready(multi_nce_loss(logits, labels))
    ref = jax.block_until_ready(_reference(logits, labels))

    assert jnp.allclose(loss, ref, rtol=1e-5, atol=1e-5), (loss, ref)
    print("KERNEL_OK")
</pallas_src>

<mosaic_0001>
module attributes {stable_mosaic.version = 11 : i64} {
  func.func @_multi_nce_kernel(%arg0: i32, %arg1: memref<8x32xf32, #tpu.memory_space<vmem>>, %arg2: memref<8x32xf32, #tpu.memory_space<vmem>>, %arg3: memref<8x128xf32, #tpu.memory_space<vmem>>) attributes {dimension_semantics = [#tpu.dimension_semantics<parallel>], iteration_bounds = array<i64: 1>, scalar_prefetch = 0 : i64, scratch_operands = 0 : i64, tpu.core_type = #tpu.core_type<tc>, window_params = [{transform_indices = @transform_0, window_bounds = array<i64: 8, 32>}, {transform_indices = @transform_1, window_bounds = array<i64: 8, 32>}, {transform_indices = @transform_2, window_bounds = array<i64: 8, 128>}]} {
    %c0 = arith.constant 0 : index
    %c0_0 = arith.constant 0 : index
    %0 = vector.load %arg1[%c0, %c0_0] : memref<8x32xf32, #tpu.memory_space<vmem>>, vector<8x32xf32>
    %c0_1 = arith.constant 0 : index
    %c0_2 = arith.constant 0 : index
    %1 = vector.load %arg2[%c0_1, %c0_2] : memref<8x32xf32, #tpu.memory_space<vmem>>, vector<8x32xf32>
    %cst = arith.constant dense<0xFF800000> : vector<8xf32>
    %2 = vector.multi_reduction <maximumf>, %0, %cst [1] : vector<8x32xf32> to vector<8xf32>
    %3 = vector.shape_cast %2 : vector<8xf32> to vector<8x1xf32>
    %4 = vector.broadcast %3 : vector<8x1xf32> to vector<8x32xf32>
    %5 = arith.subf %0, %4 : vector<8x32xf32>
    %6 = math.exp %5 : vector<8x32xf32>
    %cst_3 = arith.constant dense<0.000000e+00> : vector<8xf32>
    %7 = vector.multi_reduction <add>, %6, %cst_3 [1] : vector<8x32xf32> to vector<8xf32>
    %8 = vector.shape_cast %7 : vector<8xf32> to vector<8x1xf32>
    %9 = arith.mulf %6, %1 : vector<8x32xf32>
    %cst_4 = arith.constant dense<0.000000e+00> : vector<8xf32>
    %10 = vector.multi_reduction <add>, %9, %cst_4 [1] : vector<8x32xf32> to vector<8xf32>
    %11 = vector.shape_cast %10 : vector<8xf32> to vector<8x1xf32>
    %12 = math.log %8 : vector<8x1xf32>
    %13 = math.log %11 : vector<8x1xf32>
    %14 = arith.subf %12, %13 : vector<8x1xf32>
    %15 = vector.shape_cast %14 : vector<8x1xf32> to vector<1x8x1xf32>
    %cst_5 = arith.constant dense<0.000000e+00> : vector<1xf32>
    %16 = vector.multi_reduction <add>, %15, %cst_5 [1, 2] : vector<1x8x1xf32> to vector<1xf32>
    %17 = vector.shape_cast %16 : vector<1xf32> to vector<1x1x1xf32>
    %18 = vector.extract %17[0, 0, 0] : f32 from vector<1x1x1xf32>
    %19 = vector.broadcast %18 : f32 to vector<8x128xf32>
    %c0_6 = arith.constant 0 : index
    %c0_7 = arith.constant 0 : index
    %20 = vector.load %arg3[%c0_6, %c0_7] : memref<8x128xf32, #tpu.memory_space<vmem>>, vector<8x128xf32>
    tpu.vector_store %arg3[%c0_6, %c0_7], %19 {strides = array<i32>} : memref<8x128xf32, #tpu.memory_space<vmem>>, vector<8x128xf32>,
    return
  }
  func.func @transform_0(%arg0: i32) -> (i32, i32) {
    %c0_i32 = arith.constant 0 : i32
    %c0_i32_0 = arith.constant 0 : i32
    return %arg0, %c0_i32 : i32, i32
  }
  func.func @transform_1(%arg0: i32) -> (i32, i32) {
    %c0_i32 = arith.constant 0 : i32
    %c0_i32_0 = arith.constant 0 : i32
    return %arg0, %c0_i32 : i32, i32
  }
  func.func @transform_2(%arg0: i32) -> (i32, i32) {
    %c0_i32 = arith.constant 0 : i32
    %c0_i32_0 = arith.constant 0 : i32
    return %arg0, %c0_i32 : i32, i32
  }
}

</mosaic_0001>

<llo_original>
// kernel: tpu_custom_call.1
$region0: #{tpu_custom_call.1}
  #allocation0 [shape = 'u32[]', space=smem, size = 0x4, offset = 0x4, fixed_abs, tag = 'smem constant byte address 0x4 - core index']
  #allocation1 [shape = 'u32[144,128]{1,0:T(1,128)}', space=vmem, size = 0x12000, scoped, tag = 'internal scratch']
  %s0 = inlined_call_operand.hbm [shape: f32[8,32], index: 0, kind: input, shape index: {}]
  %s1 = inlined_call_operand.hbm [shape: f32[8,32], index: 1, kind: input, shape index: {}]
  %s2 = inlined_call_operand.hbm [shape: f32[8,128], index: 2, kind: output, shape index: {}]
  %s3 = sld [smem:[#allocation0]]
  $region26: #{tpu_custom_call.1} parent=0
    _
  %s5 = ssub.s32 1, %s3
  %s6 = scalar_select 0, %s5, %s3
  $region1: #{tpu_custom_call.1} parent=0
    #allocation2 [shape = 'u8[4096]{0}', space=vmem, size = 0x1000, scoped, tag = 'input window, operand 0, single buffered']
    #allocation3 [shape = 's32[1]{0}', space=sflag, size = 0x4, scoped, tag = 'scoped memory for tpu_custom_call.1']
    #allocation4 [shape = 's32[1]{0}', space=sflag, size = 0x4, scoped, tag = 'scoped memory for tpu_custom_call.1']
    #allocation5 [shape = 'u8[4096]{0}', space=vmem, size = 0x1000, scoped, tag = 'input window, operand 1, single buffered']
    #allocation6 [shape = 's32[1]{0}', space=sflag, size = 0x4, scoped, tag = 'scoped memory for tpu_custom_call.1']
    #allocation7 [shape = 'u8[4096]{0}', space=vmem, size = 0x1000, scoped, tag = 'output window, operand 0, single buffered']
    %7 = vsyncpa [#allocation3], 0
    %8 = vsyncpa [#allocation6], 0
    %9 = vsyncpa [#allocation4], 0
    // Predicated region
    $region2: #{tpu_custom_call.1} parent=1 // pred_check
      _
    $region3: #{tpu_custom_call.1} parent=1 // pred_check_branch
      %11 = sbr.rel (0) target = $region5
    $region4: #{tpu_custom_call.1} parent=1 // pred_region
      %s13 = ssub.s32 128, 128
      %14 = vsyncadd [#allocation3], %s13
      %s16 = sshll.u32 [#allocation2], 4
      %s17 = int_to_ptr.vmem [resolvable:$true] %s16
      %19 = dma.hbm_to_vmem [thread:$0]  %s0, 128, %s17, [#allocation3]
    $region5: #{tpu_custom_call.1} parent=1 // pred_fallthru
      _
    // Predicated region
    $region6: #{tpu_custom_call.1} parent=1 // pred_check
      _
    $region7: #{tpu_custom_call.1} parent=1 // pred_check_branch
      %21 = sbr.rel (0) target = $region9
    $region8: #{tpu_custom_call.1} parent=1 // pred_region
      %s23 = ssub.s32 128, 128
      %24 = vsyncadd [#allocation6], %s23
      %s26 = sshll.u32 [#allocation5], 4
      %s27 = int_to_ptr.vmem [resolvable:$true] %s26
      %29 = dma.hbm_to_vmem [thread:$0]  %s1, 128, %s27, [#allocation6]
    $region9: #{tpu_custom_call.1} parent=1 // pred_fallthru
      _
    // Predicated region
    $region10: #{tpu_custom_call.1} parent=1 // pred_check
      _
    $region11: #{tpu_custom_call.1} parent=1 // pred_check_branch
      %31 = sbr.rel (0) target = $region13
    $region12: #{tpu_custom_call.1} parent=1 // pred_region
      %32 = dma.done [#allocation3], 128
    $region13: #{tpu_custom_call.1} parent=1 // pred_fallthru
      _
    // Predicated region
    $region14: #{tpu_custom_call.1} parent=1 // pred_check
      _
    $region15: #{tpu_custom_call.1} parent=1 // pred_check_branch
      %34 = sbr.rel (0) target = $region17
    $region16: #{tpu_custom_call.1} parent=1 // pred_region
      %35 = dma.done [#allocation6], 128
    $region17: #{tpu_custom_call.1} parent=1 // pred_fallthru
      _
    %v36 = vld [vmem:[#allocation2] sm:$0xff]
    %v37 = vld [vmem:[#allocation5] sm:$0xff]
    %vm38 = vcmask 261120
    %v39 = vsel %vm38, %v36, -inf
    %40 = vmax.xlane.f32.xlu0 %v39
    %v41 = vpop.xlane.xlu0 %40
    %v42 = vsub.f32 %v36, %v41
    %v43 = vmul.f32 %v42, 1.442695
    %v44 = vpow.pop %v43
    %v45 = vsel %vm38, %v44, 0.0
    %46 = vadd.xlane.f32.xlu0 %v45
    %v47 = vpop.xlane.xlu0 %46
    %v48 = vmul.f32 %v44, %v37
    %v49 = vsel %vm38, %v48, 0.0
    %50 = vadd.xlane.f32.xlu0 %v49
    %v51 = vpop.xlane.xlu0 %50
    %v52 = vlog2.pop %v47
    %v53 = vmul.f32 %v52, 0.6931472
    %v54 = vlog2.pop %v51
    %v55 = vmul.f32 %v54, 0.6931472
    %v56 = vsub.f32 %v53, %v55
    %vm57 = vcmask 7168
    %v58 = vsel %vm57, %v56, 0.0
    %59 = vadd.xlane.f32.xlu0 %v58
    %v60 = vpop.xlane.xlu0 %59
    %v61 = vrot.slane %v60, 4
    %v62 = vadd.f32 %v60, %v61
    %v63 = vrot.slane %v62, 2
    %v64 = vadd.f32 %v62, %v63
    %v65 = vrot.slane %v64, 1
    %v66 = vadd.f32 %v64, %v65
    %s67 = vtos %v66
    %v68 = vstv %s67
    %69 = vst [vmem:[#allocation7] sm:$0xff] %v68
    // Predicated region
    $region18: #{tpu_custom_call.1} parent=1 // pred_check
      _
    $region19: #{tpu_custom_call.1} parent=1 // pred_check_branch
      %71 = sbr.rel (0) target = $region21
    $region20: #{tpu_custom_call.1} parent=1 // pred_region
      %s73 = ssub.s32 128, 128
      %74 = vsyncadd [#allocation4], %s73
      %s76 = sshll.u32 [#allocation7], 4
      %s77 = int_to_ptr.vmem [resolvable:$true] %s76
      %79 = dma.vmem_to_hbm [thread:$0]  %s77, 128, %s2, [#allocation4]
    $region21: #{tpu_custom_call.1} parent=1 // pred_fallthru
      _
    // Predicated region
    $region22: #{tpu_custom_call.1} parent=1 // pred_check
      _
    $region23: #{tpu_custom_call.1} parent=1 // pred_check_branch
      %81 = sbr.rel (0) target = $region25
    $region24: #{tpu_custom_call.1} parent=1 // pred_region
      %82 = dma.done [#allocation4], 128
    $region25: #{tpu_custom_call.1} parent=1 // pred_fallthru
      _
    %83 = vsyncpa [#allocation3], 1
    %84 = vsyncpa [#allocation6], 1
    %85 = vsyncpa [#allocation4], 1

</llo_original>
